<compile_context>
chip_gen: v6e
topology: v6e:2x2x1
jax: 0.10.0
libtpu: 0.0.40
codegen_flags: <defaults>
</compile_context>

<pallas_src>
import numpy as np
import jax
import jax.numpy as jnp
from jax.experimental import pallas as pl
from jax.experimental.pallas import tpu as pltpu


def _round_up(x: int, m: int) -> int:
    return ((x + m - 1) // m) * m


def _build_embedding(num_steps: int, dim: int) -> jnp.ndarray:
    """Equivalent of DiffusionEmbedding._build_embedding (float32, shape (T, 2*dim))."""
    steps = jnp.arange(num_steps, dtype=jnp.float32)[:, None]                          # (T, 1)
    freqs = 10.0 ** (jnp.arange(dim, dtype=jnp.float32) / (dim - 1) * 4.0)[None, :]    # (1, dim)
    table = steps * freqs
    return jnp.concatenate([jnp.sin(table), jnp.cos(table)], axis=1)                   # (T, 2*dim)


def prepare_embedding_table(embedding: jnp.ndarray, row_align: int = 16) -> jnp.ndarray:
    """Split the f32 table into three bf16-exact planes stacked on rows -> (3*T_pad, E) bf16.

    hi/mid/lo are each exactly representable in bf16, so the in-kernel one-hot gather
    matmul (bf16 operands, f32 accumulation) reconstructs the original f32 rows to
    ~f32 precision regardless of the MXU precision mode.  Each plane is row-padded to
    a multiple of `row_align` (16 for bf16 sublane packing) so the resident VMEM block
    is layout-aligned; valid step indices never hit the zero padding rows.
    Done once at module-init time (analogue of register_buffer).
    """
    t, _ = embedding.shape
    hi = embedding.astype(jnp.bfloat16).astype(jnp.float32)
    r1 = embedding - hi
    mid = r1.astype(jnp.bfloat16).astype(jnp.float32)
    lo = r1 - mid
    t_pad = _round_up(t, row_align)
    pad = ((0, t_pad - t), (0, 0))
    planes = [jnp.pad(p, pad).astype(jnp.bfloat16) for p in (hi, mid, lo)]
    return jnp.concatenate(planes, axis=0)                                              # (3*T_pad, E)


def _diffusion_emb_kernel(step_ref, emb3_ref, w1_ref, b1_ref, w2_ref, b2_ref, o_ref):
    # step_ref : (bm, 1)      int32  diffusion-step indices for this block
    # emb3_ref : (3*T_pad, E) bf16   sinusoidal table split into bf16-exact [hi; mid; lo]
    # w1_ref   : (E, P)              projection1 weight (f32 or bf16), transposed vs. PyTorch
    # b1_ref   : (1, P)       f32
    # w2_ref   : (P, P)              projection2 weight (f32 or bf16), transposed vs. PyTorch
    # b2_ref   : (1, P)       f32
    # o_ref    : (bm, P)      f32
    steps = step_ref[...]                                    # (bm, 1) int32
    emb3 = emb3_ref[...]                                     # (3*T_pad, E)
    bm = steps.shape[0]
    t3 = emb3.shape[0]
    t = t3 // 3                                              # = T_pad

    # Fused gather: one-hot(step) over the three stacked planes, contracted on the
    # MXU with f32 accumulation.  hi + mid + lo reconstructs the f32 embedding row
    # (each plane is bf16-exact, so the bf16 products are exact).
    j = jax.lax.broadcasted_iota(jnp.int32, (bm, t3), 1)
    hit = (j == steps) | (j == steps + t) | (j == steps + 2 * t)
    x = jnp.dot(hit.astype(emb3.dtype), emb3,
                preferred_element_type=jnp.float32)          # (bm, E) f32

    # projection1 + SiLU (bias add + SiLU kept in f32: EUP slot is free vs. MXU/DMA; v5e-safe)
    h = jnp.dot(x.astype(w1_ref.dtype), w1_ref[...],
                preferred_element_type=jnp.float32) + b1_ref[...]
    h = h * jax.nn.sigmoid(h)

    # projection2 + SiLU
    y = jnp.dot(h.astype(w2_ref.dtype), w2_ref[...],
                preferred_element_type=jnp.float32) + b2_ref[...]
    y = y * jax.nn.sigmoid(y)

    o_ref[...] = y.astype(o_ref.dtype)


def diffusion_embedding_forward(diffusion_step, emb3, w1, b1, w2, b2, *,
                                bm=None, use_bf16=False):
    """Fused DiffusionEmbedding forward.

    diffusion_step : int (B,) indices into the table
    emb3           : (3*T_pad, E) bf16, from prepare_embedding_table()
    w1, b1, w2, b2 : Linear params, weights stored as (in, out) = W.T
    returns (B, P) float32
    """
    B = diffusion_step.shape[0]
    T3, E = emb3.shape
    P = w1.shape[1]

    if bm is None:
        # Fill the MXU M dim, keep the grid short; cap at 256 so very large batches
        # still split into >=2 "parallel" grid steps (v7x: 2 TensorCores/chip).
        bm = min(256, _round_up(B, 8))
    bm = _round_up(bm, 8)
    B_pad = _round_up(B, bm)

    steps = diffusion_step.astype(jnp.int32).reshape(B, 1)
    if B_pad != B:                     # pad only the tiny int index vector
        steps = jnp.pad(steps, ((0, B_pad - B), (0, 0)))

    if use_bf16:                       # MXU operands only; SiLU/bias stay f32 in-kernel
        w1 = w1.astype(jnp.bfloat16)
        w2 = w2.astype(jnp.bfloat16)

    cost = pl.CostEstimate(
        flops=int(2 * B_pad * (T3 * E + E * P + P * P)),
        transcendentals=int(2 * B_pad * P),
        bytes_accessed=int(sum(a.size * a.dtype.itemsize
                               for a in (steps, emb3, w1, b1, w2, b2)) + 4 * B_pad * P),
    )

    def call(single_buffer_resident: bool):
        # Resident operands (table/weights/biases) never change across grid steps,
        # so request a single VMEM buffer for them instead of the default two.
        resident = (dict(pipeline_mode=pl.Buffered(buffer_count=1))
                    if single_buffer_resident else {})
        grid_spec = pltpu.PrefetchScalarGridSpec(
            num_scalar_prefetch=0,
            grid=(B_pad // bm,),
            in_specs=[
                pl.BlockSpec((bm, 1), lambda i: (i, 0)),              # step indices
                pl.BlockSpec((T3, E), lambda i: (0, 0), **resident),  # split table (resident, bf16)
                pl.BlockSpec((E, P), lambda i: (0, 0), **resident),   # W1 (resident)
                pl.BlockSpec((1, P), lambda i: (0, 0), **resident),   # b1
                pl.BlockSpec((P, P), lambda i: (0, 0), **resident),   # W2 (resident)
                pl.BlockSpec((1, P), lambda i: (0, 0), **resident),   # b2
            ],
            out_specs=pl.BlockSpec((bm, P), lambda i: (i, 0)),
        )
        return pl.pallas_call(
            _diffusion_emb_kernel,
            out_shape=jax.ShapeDtypeStruct((B_pad, P), jnp.float32),
            grid_spec=grid_spec,
            compiler_params=pltpu.CompilerParams(
                dimension_semantics=("parallel",)),
            cost_estimate=cost,
        )(steps, emb3, w1, b1, w2, b2)

    try:
        out = call(True)
    except Exception:
        # pipeline_mode=pl.Buffered(1) not supported by this jax build -> default buffering.
        out = call(False)

    return out if B_pad == B else out[:B]


def _reference_forward(diffusion_step, embedding, w1, b1, w2, b2):
    x = embedding[diffusion_step]
    h = x @ w1 + b1[0]
    h = h * jax.nn.sigmoid(h)
    y = h @ w2 + b2[0]
    return y * jax.nn.sigmoid(y)


if __name__ == "__main__":
    num_steps = 50
    embedding_dim = 128
    projection_dim = 128
    batch = 8

    key = jax.random.PRNGKey(0)
    k1, k2, k3, k4, k5 = jax.random.split(key, 5)
    bound1 = 1.0 / np.sqrt(embedding_dim)
    bound2 = 1.0 / np.sqrt(projection_dim)
    # Stored transposed relative to PyTorch nn.Linear.weight: (in, out).
    w1 = jax.random.uniform(k1, (embedding_dim, projection_dim), jnp.float32, -bound1, bound1)
    b1 = jax.random.uniform(k2, (1, projection_dim), jnp.float32, -bound1, bound1)
    w2 = jax.random.uniform(k3, (projection_dim, projection_dim), jnp.float32, -bound2, bound2)
    b2 = jax.random.uniform(k4, (1, projection_dim), jnp.float32, -bound2, bound2)

    embedding = _build_embedding(num_steps, embedding_dim // 2)   # (50, 128) f32
    emb3 = prepare_embedding_table(embedding)                     # (192, 128) bf16, built once at init

    diffusion_step = jax.random.randint(k5, (batch,), 0, num_steps, dtype=jnp.int32)

    ref = _reference_forward(diffusion_step, embedding, w1, b1, w2, b2)

    # f32-weight path (fused ~exact gather + f32 projection matmuls)
    out = diffusion_embedding_forward(diffusion_step, emb3, w1, b1, w2, b2)
    out = jax.block_until_ready(out)
    np.testing.assert_allclose(np.asarray(out), np.asarray(ref), rtol=1e-5, atol=1e-5)

    # bf16 MXU-operand path (v6e/v7x throughput option; SiLU/bias stay f32)
    out_bf16 = diffusion_embedding_forward(diffusion_step, emb3, w1, b1, w2, b2, use_bf16=True)
    out_bf16 = jax.block_until_ready(out_bf16)
    np.testing.assert_allclose(np.asarray(out_bf16), np.asarray(ref), rtol=5e-2, atol=5e-2)

    print("KERNEL_OK")
</pallas_src>

<mosaic_0001>
module attributes {stable_mosaic.version = 11 : i64} {
  func.func @_diffusion_emb_kernel(%arg0: i32, %arg1: memref<8x1xi32, #tpu.memory_space<vmem>>, %arg2: memref<192x128xbf16, #tpu.memory_space<vmem>>, %arg3: memref<128x128xf32, #tpu.memory_space<vmem>>, %arg4: memref<1x128xf32, #tpu.memory_space<vmem>>, %arg5: memref<128x128xf32, #tpu.memory_space<vmem>>, %arg6: memref<1x128xf32, #tpu.memory_space<vmem>>, %arg7: memref<8x128xf32, #tpu.memory_space<vmem>>) attributes {dimension_semantics = [#tpu.dimension_semantics<parallel>], iteration_bounds = array<i64: 1>, scalar_prefetch = 0 : i64, scratch_operands = 0 : i64, tpu.core_type = #tpu.core_type<tc>, window_params = [{transform_indices = @transform_0, window_bounds = array<i64: 8, 1>}, {pipeline_mode = #tpu.pipeline_mode<synchronous>, transform_indices = @transform_1, window_bounds = array<i64: 192, 128>}, {pipeline_mode = #tpu.pipeline_mode<synchronous>, transform_indices = @transform_2, window_bounds = array<i64: 128, 128>}, {pipeline_mode = #tpu.pipeline_mode<synchronous>, transform_indices = @transform_3, window_bounds = array<i64: 1, 128>}, {pipeline_mode = #tpu.pipeline_mode<synchronous>, transform_indices = @transform_4, window_bounds = array<i64: 128, 128>}, {pipeline_mode = #tpu.pipeline_mode<synchronous>, transform_indices = @transform_5, window_bounds = array<i64: 1, 128>}, {transform_indices = @transform_6, window_bounds = array<i64: 8, 128>}]} {
    %c0 = arith.constant 0 : index
    %c0_0 = arith.constant 0 : index
    %0 = vector.load %arg1[%c0, %c0_0] : memref<8x1xi32, #tpu.memory_space<vmem>>, vector<8x1xi32>
    %c0_1 = arith.constant 0 : index
    %c0_2 = arith.constant 0 : index
    %1 = vector.load %arg2[%c0_1, %c0_2] : memref<192x128xbf16, #tpu.memory_space<vmem>>, vector<192x128xbf16>
    %2 = tpu.iota {dimensions = array<i32: 1>} : vector<8x192xi32>
    %3 = vector.broadcast %0 : vector<8x1xi32> to vector<8x192xi32>
    %4 = arith.cmpi eq, %2, %3 : vector<8x192xi32>
    %c64_i32 = arith.constant 64 : i32
    %5 = vector.broadcast %c64_i32 : i32 to vector<8x1xi32>
    %6 = arith.addi %0, %5 : vector<8x1xi32>
    %7 = vector.broadcast %6 : vector<8x1xi32> to vector<8x192xi32>
    %8 = arith.cmpi eq, %2, %7 : vector<8x192xi32>
    %9 = arith.ori %4, %8 : vector<8x192xi1>
    %c128_i32 = arith.constant 128 : i32
    %10 = vector.broadcast %c128_i32 : i32 to vector<8x1xi32>
    %11 = arith.addi %0, %10 : vector<8x1xi32>
    %12 = vector.broadcast %11 : vector<8x1xi32> to vector<8x192xi32>
    %13 = arith.cmpi eq, %2, %12 : vector<8x192xi32>
    %14 = arith.ori %9, %13 : vector<8x192xi1>
    %15 = arith.extui %14 : vector<8x192xi1> to vector<8x192xi32>
    %16 = arith.sitofp %15 : vector<8x192xi32> to vector<8x192xf32>
    %17 = arith.truncf %16 : vector<8x192xf32> to vector<8x192xbf16>
    %cst = arith.constant dense<0.000000e+00> : vector<8x128xf32>
    %18 = tpu.matmul %17, %1, %cst {dimension_numbers = #tpu.dot_dimension_numbers<[1], [0], [0], [1], [0, 0, 1, 1], [], []>} : vector<8x192xbf16>, vector<192x128xbf16>, vector<8x128xf32> -> vector<8x128xf32>
    %c0_3 = arith.constant 0 : index
    %c0_4 = arith.constant 0 : index
    %19 = vector.load %arg3[%c0_3, %c0_4] : memref<128x128xf32, #tpu.memory_space<vmem>>, vector<128x128xf32>
    %cst_5 = arith.constant dense<0.000000e+00> : vector<8x128xf32>
    %20 = tpu.matmul %18, %19, %cst_5 {dimension_numbers = #tpu.dot_dimension_numbers<[1], [0], [0], [1], [0, 0, 1, 1], [], []>} : vector<8x128xf32>, vector<128x128xf32>, vector<8x128xf32> -> vector<8x128xf32>
    %c0_6 = arith.constant 0 : index
    %c0_7 = arith.constant 0 : index
    %21 = vector.load %arg4[%c0_6, %c0_7] : memref<1x128xf32, #tpu.memory_space<vmem>>, vector<1x128xf32>
    %22 = vector.broadcast %21 : vector<1x128xf32> to vector<8x128xf32>
    %23 = arith.addf %20, %22 : vector<8x128xf32>
    %24 = arith.negf %23 : vector<8x128xf32>
    %25 = math.exp %24 : vector<8x128xf32>
    %cst_8 = arith.constant 1.000000e+00 : f32
    %26 = vector.broadcast %cst_8 : f32 to vector<8x128xf32>
    %27 = arith.addf %26, %25 : vector<8x128xf32>
    %28 = arith.divf %26, %27 : vector<8x128xf32>
    %29 = arith.mulf %23, %28 : vector<8x128xf32>
    %c0_9 = arith.constant 0 : index
    %c0_10 = arith.constant 0 : index
    %30 = vector.load %arg5[%c0_9, %c0_10] : memref<128x128xf32, #tpu.memory_space<vmem>>, vector<128x128xf32>
    %cst_11 = arith.constant dense<0.000000e+00> : vector<8x128xf32>
    %31 = tpu.matmul %29, %30, %cst_11 {dimension_numbers = #tpu.dot_dimension_numbers<[1], [0], [0], [1], [0, 0, 1, 1], [], []>} : vector<8x128xf32>, vector<128x128xf32>, vector<8x128xf32> -> vector<8x128xf32>
    %c0_12 = arith.constant 0 : index
    %c0_13 = arith.constant 0 : index
    %32 = vector.load %arg6[%c0_12, %c0_13] : memref<1x128xf32, #tpu.memory_space<vmem>>, vector<1x128xf32>
    %33 = vector.broadcast %32 : vector<1x128xf32> to vector<8x128xf32>
    %34 = arith.addf %31, %33 : vector<8x128xf32>
    %35 = arith.negf %34 : vector<8x128xf32>
    %36 = math.exp %35 : vector<8x128xf32>
    %cst_14 = arith.constant 1.000000e+00 : f32
    %37 = vector.broadcast %cst_14 : f32 to vector<8x128xf32>
    %38 = arith.addf %37, %36 : vector<8x128xf32>
    %39 = arith.divf %37, %38 : vector<8x128xf32>
    %40 = arith.mulf %34, %39 : vector<8x128xf32>
    %c0_15 = arith.constant 0 : index
    %c0_16 = arith.constant 0 : index
    %41 = vector.load %arg7[%c0_15, %c0_16] : memref<8x128xf32, #tpu.memory_space<vmem>>, vector<8x128xf32>
    tpu.vector_store %arg7[%c0_15, %c0_16], %40 {strides = array<i32>} : memref<8x128xf32, #tpu.memory_space<vmem>>, vector<8x128xf32>,
    return
  }
  func.func @transform_0(%arg0: i32) -> (i32, i32) {
    %c0_i32 = arith.constant 0 : i32
    %c0_i32_0 = arith.constant 0 : i32
    return %arg0, %c0_i32 : i32, i32
  }
  func.func @transform_1(%arg0: i32) -> (i32, i32) {
    %c0_i32 = arith.constant 0 : i32
    %c0_i32_0 = arith.constant 0 : i32
    %c0_i32_1 = arith.constant 0 : i32
    return %c0_i32, %c0_i32_0 : i32, i32
  }
  func.func @transform_2(%arg0: i32) -> (i32, i32) {
    %c0_i32 = arith.constant 0 : i32
    %c0_i32_0 = arith.constant 0 : i32
    %c0_i32_1 = arith.constant 0 : i32
    return %c0_i32, %c0_i32_0 : i32, i32
  }
  func.func @transform_3(%arg0: i32) -> (i32, i32) {
    %c0_i32 = arith.constant 0 : i32
    %c0_i32_0 = arith.constant 0 : i32
    %c0_i32_1 = arith.constant 0 : i32
    return %c0_i32, %c0_i32_0 : i32, i32
  }
  func.func @transform_4(%arg0: i32) -> (i32, i32) {
    %c0_i32 = arith.constant 0 : i32
    %c0_i32_0 = arith.constant 0 : i32
    %c0_i32_1 = arith.constant 0 : i32
    return %c0_i32, %c0_i32_0 : i32, i32
  }
  func.func @transform_5(%arg0: i32) -> (i32, i32) {
    %c0_i32 = arith.constant 0 : i32
    %c0_i32_0 = arith.constant 0 : i32
    %c0_i32_1 = arith.constant 0 : i32
    return %c0_i32, %c0_i32_0 : i32, i32
  }
  func.func @transform_6(%arg0: i32) -> (i32, i32) {
    %c0_i32 = arith.constant 0 : i32
    %c0_i32_0 = arith.constant 0 : i32
    return %arg0, %c0_i32 : i32, i32
  }
}

module attributes {stable_mosaic.version = 11 : i64} {
  func.func @_diffusion_emb_kernel(%arg0: i32, %arg1: memref<8x1xi32, #tpu.memory_space<vmem>>, %arg2: memref<192x128xbf16, #tpu.memory_space<vmem>>, %arg3: memref<128x128xf32, #tpu.memory_space<vmem>>, %arg4: memref<1x128xf32, #tpu.memory_space<vmem>>, %arg5: memref<128x128xf32, #tpu.memory_space<vmem>>, %arg6: memref<1x128xf32, #tpu.memory_space<vmem>>, %arg7: memref<8x128xf32, #tpu.memory_space<vmem>>) attributes {dimension_semantics = [#tpu.dimension_semantics<parallel>], iteration_bounds = array<i64: 1>, scalar_prefetch = 0 : i64, scratch_operands = 0 : i64, tpu.core_type = #tpu.core_type<tc>, window_params = [{transform_indices = @transform_0, window_bounds = array<i64: 8, 1>}, {pipeline_mode = #tpu.pipeline_mode<synchronous>, transform_indices = @transform_1, window_bounds = array<i64: 192, 128>}, {pipeline_mode = #tpu.pipeline_mode<synchronous>, transform_indices = @transform_2, window_bounds = array<i64: 128, 128>}, {pipeline_mode = #tpu.pipeline_mode<synchronous>, transform_indices = @transform_3, window_bounds = array<i64: 1, 128>}, {pipeline_mode = #tpu.pipeline_mode<synchronous>, transform_indices = @transform_4, window_bounds = array<i64: 128, 128>}, {pipeline_mode = #tpu.pipeline_mode<synchronous>, transform_indices = @transform_5, window_bounds = array<i64: 1, 128>}, {transform_indices = @transform_6, window_bounds = array<i64: 8, 128>}]} {
    %c0 = arith.constant 0 : index
    %c0_0 = arith.constant 0 : index
    %0 = vector.load %arg1[%c0, %c0_0] : memref<8x1xi32, #tpu.memory_space<vmem>>, vector<8x1xi32>
    %c0_1 = arith.constant 0 : index
    %c0_2 = arith.constant 0 : index
    %1 = vector.load %arg2[%c0_1, %c0_2] : memref<192x128xbf16, #tpu.memory_space<vmem>>, vector<192x128xbf16>
    %2 = tpu.iota {dimensions = array<i32: 1>} : vector<8x192xi32>
    %3 = vector.broadcast %0 : vector<8x1xi32> to vector<8x192xi32>
    %4 = arith.cmpi eq, %2, %3 : vector<8x192xi32>
    %c64_i32 = arith.constant 64 : i32
    %5 = vector.broadcast %c64_i32 : i32 to vector<8x1xi32>
    %6 = arith.addi %0, %5 : vector<8x1xi32>
    %7 = vector.broadcast %6 : vector<8x1xi32> to vector<8x192xi32>
    %8 = arith.cmpi eq, %2, %7 : vector<8x192xi32>
    %9 = arith.ori %4, %8 : vector<8x192xi1>
    %c128_i32 = arith.constant 128 : i32
    %10 = vector.broadcast %c128_i32 : i32 to vector<8x1xi32>
    %11 = arith.addi %0, %10 : vector<8x1xi32>
    %12 = vector.broadcast %11 : vector<8x1xi32> to vector<8x192xi32>
    %13 = arith.cmpi eq, %2, %12 : vector<8x192xi32>
    %14 = arith.ori %9, %13 : vector<8x192xi1>
    %15 = arith.extui %14 : vector<8x192xi1> to vector<8x192xi32>
    %16 = arith.sitofp %15 : vector<8x192xi32> to vector<8x192xf32>
    %17 = arith.truncf %16 : vector<8x192xf32> to vector<8x192xbf16>
    %cst = arith.constant dense<0.000000e+00> : vector<8x128xf32>
    %18 = tpu.matmul %17, %1, %cst {dimension_numbers = #tpu.dot_dimension_numbers<[1], [0], [0], [1], [0, 0, 1, 1], [], []>} : vector<8x192xbf16>, vector<192x128xbf16>, vector<8x128xf32> -> vector<8x128xf32>
    %c0_3 = arith.constant 0 : index
    %c0_4 = arith.constant 0 : index
    %19 = vector.load %arg3[%c0_3, %c0_4] : memref<128x128xf32, #tpu.memory_space<vmem>>, vector<128x128xf32>
    %cst_5 = arith.constant dense<0.000000e+00> : vector<8x128xf32>
    %20 = tpu.matmul %18, %19, %cst_5 {dimension_numbers = #tpu.dot_dimension_numbers<[1], [0], [0], [1], [0, 0, 1, 1], [], []>} : vector<8x128xf32>, vector<128x128xf32>, vector<8x128xf32> -> vector<8x128xf32>
    %c0_6 = arith.constant 0 : index
    %c0_7 = arith.constant 0 : index
    %21 = vector.load %arg4[%c0_6, %c0_7] : memref<1x128xf32, #tpu.memory_space<vmem>>, vector<1x128xf32>
    %22 = vector.broadcast %21 : vector<1x128xf32> to vector<8x128xf32>
    %23 = arith.addf %20, %22 : vector<8x128xf32>
    %24 = arith.negf %23 : vector<8x128xf32>
    %25 = math.exp %24 : vector<8x128xf32>
    %cst_8 = arith.constant 1.000000e+00 : f32
    %26 = vector.broadcast %cst_8 : f32 to vector<8x128xf32>
    %27 = arith.addf %26, %25 : vector<8x128xf32>
    %28 = arith.divf %26, %27 : vector<8x128xf32>
    %29 = arith.mulf %23, %28 : vector<8x128xf32>
    %c0_9 = arith.constant 0 : index
    %c0_10 = arith.constant 0 : index
    %30 = vector.load %arg5[%c0_9, %c0_10] : memref<128x128xf32, #tpu.memory_space<vmem>>, vector<128x128xf32>
    %cst_11 = arith.constant dense<0.000000e+00> : vector<8x128xf32>
    %31 = tpu.matmul %29, %30, %cst_11 {dimension_numbers = #tpu.dot_dimension_numbers<[1], [0], [0], [1], [0, 0, 1, 1], [], []>} : vector<8x128xf32>, vector<128x128xf32>, vector<8x128xf32> -> vector<8x128xf32>
    %c0_12 = arith.constant 0 : index
    %c0_13 = arith.constant 0 : index
    %32 = vector.load %arg6[%c0_12, %c0_13] : memref<1x128xf32, #tpu.memory_space<vmem>>, vector<1x128xf32>
    %33 = vector.broadcast %32 : vector<1x128xf32> to vector<8x128xf32>
    %34 = arith.addf %31, %33 : vector<8x128xf32>
    %35 = arith.negf %34 : vector<8x128xf32>
    %36 = math.exp %35 : vector<8x128xf32>
    %cst_14 = arith.constant 1.000000e+00 : f32
    %37 = vector.broadcast %cst_14 : f32 to vector<8x128xf32>
    %38 = arith.addf %37, %36 : vector<8x128xf32>
    %39 = arith.divf %37, %38 : vector<8x128xf32>
    %40 = arith.mulf %34, %39 : vector<8x128xf32>
    %c0_15 = arith.constant 0 : index
    %c0_16 = arith.constant 0 : index
    %41 = vector.load %arg7[%c0_15, %c0_16] : memref<8x128xf32, #tpu.memory_space<vmem>>, vector<8x128xf32>
    tpu.vector_store %arg7[%c0_15, %c0_16], %40 {strides = array<i32>} : memref<8x128xf32, #tpu.memory_space<vmem>>, vector<8x128xf32>,
    return
  }
  func.func @transform_0(%arg0: i32) -> (i32, i32) {
    %c0_i32 = arith.constant 0 : i32
    %c0_i32_0 = arith.constant 0 : i32
    return %arg0, %c0_i32 : i32, i32
  }
  func.func @transform_1(%arg0: i32) -> (i32, i32) {
    %c0_i32 = arith.constant 0 : i32
    %c0_i32_0 = arith.constant 0 : i32
    %c0_i32_1 = arith.constant 0 : i32
    return %c0_i32, %c0_i32_0 : i32, i32
  }
  func.func @transform_2(%arg0: i32) -> (i32, i32) {
    %c0_i32 = arith.constant 0 : i32
    %c0_i32_0 = arith.constant 0 : i32
    %c0_i32_1 = arith.constant 0 : i32
    return %c0_i32, %c0_i32_0 : i32, i32
  }
  func.func @transform_3(%arg0: i32) -> (i32, i32) {
    %c0_i32 = arith.constant 0 : i32
    %c0_i32_0 = arith.constant 0 : i32
    %c0_i32_1 = arith.constant 0 : i32
    return %c0_i32, %c0_i32_0 : i32, i32
  }
  func.func @transform_4(%arg0: i32) -> (i32, i32) {
    %c0_i32 = arith.constant 0 : i32
    %c0_i32_0 = arith.constant 0 : i32
    %c0_i32_1 = arith.constant 0 : i32
    return %c0_i32, %c0_i32_0 : i32, i32
  }
  func.func @transform_5(%arg0: i32) -> (i32, i32) {
    %c0_i32 = arith.constant 0 : i32
    %c0_i32_0 = arith.constant 0 : i32
    %c0_i32_1 = arith.constant 0 : i32
    return %c0_i32, %c0_i32_0 : i32, i32
  }
  func.func @transform_6(%arg0: i32) -> (i32, i32) {
    %c0_i32 = arith.constant 0 : i32
    %c0_i32_0 = arith.constant 0 : i32
    return %arg0, %c0_i32 : i32, i32
  }
}

</mosaic_0001>

<llo_original>
// kernel: tpu_custom_call.1
$region0: #{tpu_custom_call.1}
  #allocation0 [shape = 'u32[]', space=smem, size = 0x4, offset = 0x4, fixed_abs, tag = 'smem constant byte address 0x4 - core index']
  #allocation1 [shape = 'u32[144,128]{1,0:T(1,128)}', space=vmem, size = 0x12000, scoped, tag = 'internal scratch']
  %s0 = inlined_call_operand.vmem [shape: s32[8,1], index: 0, kind: input, shape index: {}]
  %s1 = inlined_call_operand.hbm [shape: bf16[192,128], index: 1, kind: input, shape index: {}]
  %s2 = inlined_call_operand.hbm [shape: f32[128,128], index: 2, kind: input, shape index: {}]
  %s3 = inlined_call_operand.vmem [shape: f32[1,128], index: 3, kind: input, shape index: {}]
  %s4 = inlined_call_operand.hbm [shape: f32[128,128], index: 4, kind: input, shape index: {}]
  %s5 = inlined_call_operand.vmem [shape: f32[1,128], index: 5, kind: input, shape index: {}]
  %s6 = inlined_call_operand.hbm [shape: f32[8,128], index: 6, kind: output, shape index: {}]
  %s7 = sld [smem:[#allocation0]]
  $region46: #{tpu_custom_call.1} parent=0
    _
  %s9 = ssub.s32 1, %s7
  %s10 = scalar_select 0, %s9, %s7
  $region1: #{tpu_custom_call.1} parent=0
    #allocation2 [shape = 'u8[49152]{0}', space=vmem, size = 0xc000, scoped, tag = 'input window, operand 1, single buffered']
    #allocation3 [shape = 's32[1]{0}', space=sflag, size = 0x4, scoped, tag = 'scoped memory for tpu_custom_call.1']
    #allocation4 [shape = 's32[1]{0}', space=sflag, size = 0x4, scoped, tag = 'scoped memory for tpu_custom_call.1']
    #allocation5 [shape = 'u8[65536]{0}', space=vmem, size = 0x10000, scoped, tag = 'input window, operand 2, single buffered']
    #allocation6 [shape = 's32[1]{0}', space=sflag, size = 0x4, scoped, tag = 'scoped memory for tpu_custom_call.1']
    #allocation7 [shape = 'u8[65536]{0}', space=vmem, size = 0x10000, scoped, tag = 'input window, operand 4, single buffered']
    #allocation8 [shape = 'u8[4096]{0}', space=vmem, size = 0x1000, scoped, tag = 'output window, operand 0, single buffered']
    %11 = vsyncpa [#allocation3], 0
    %12 = vsyncpa [#allocation6], 0
    %13 = vsyncpa [#allocation4], 0
    // Predicated region
    $region2: #{tpu_custom_call.1} parent=1 // pred_check
      _
    $region3: #{tpu_custom_call.1} parent=1 // pred_check_branch
      %15 = sbr.rel (0) target = $region5
    $region4: #{tpu_custom_call.1} parent=1 // pred_region
      _
    $region5: #{tpu_custom_call.1} parent=1 // pred_fallthru
      _
    // Predicated region
    $region6: #{tpu_custom_call.1} parent=1 // pred_check
      _
    $region7: #{tpu_custom_call.1} parent=1 // pred_check_branch
      %17 = sbr.rel (0) target = $region9
    $region8: #{tpu_custom_call.1} parent=1 // pred_region
      %s19 = ssub.s32 1536, 1536
      %20 = vsyncadd [#allocation3], %s19
      %s21 = sshll.u32 [#allocation2], 4
      %s22 = int_to_ptr.vmem [resolvable:$true] %s21
      %27 = dma.hbm_to_vmem [thread:$0]  %s1, 1536, %s22, [#allocation3], 64, 64, 4
    $region9: #{tpu_custom_call.1} parent=1 // pred_fallthru
      _
    // Predicated region
    $region10: #{tpu_custom_call.1} parent=1 // pred_check
      _
    $region11: #{tpu_custom_call.1} parent=1 // pred_check_branch
      %29 = sbr.rel (0) target = $region13
    $region12: #{tpu_custom_call.1} parent=1 // pred_region
      %s31 = ssub.s32 2048, 2048
      %32 = vsyncadd [#allocation6], %s31
      %s33 = sshll.u32 [#allocation5], 4
      %s34 = int_to_ptr.vmem [resolvable:$true] %s33
      %39 = dma.hbm_to_vmem [thread:$0]  %s2, 2048, %s34, [#allocation6], 128, 128, 8
    $region13: #{tpu_custom_call.1} parent=1 // pred_fallthru
      _
    // Predicated region
    $region14: #{tpu_custom_call.1} parent=1 // pred_check
      _
    $region15: #{tpu_custom_call.1} parent=1 // pred_check_branch
      %41 = sbr.rel (0) target = $region17
    $region16: #{tpu_custom_call.1} parent=1 // pred_region
      _
    $region17: #{tpu_custom_call.1} parent=1 // pred_fallthru
      _
    // Predicated region
    $region18: #{tpu_custom_call.1} parent=1 // pred_check
      _
    $region19: #{tpu_custom_call.1} parent=1 // pred_check_branch
      %43 = sbr.rel (0) target = $region21
    $region20: #{tpu_custom_call.1} parent=1 // pred_region
      %s45 = ssub.s32 2048, 2048
      %46 = vsyncadd [#allocation6], %s45
      %s47 = sshll.u32 [#allocation7], 4
      %s48 = int_to_ptr.vmem [resolvable:$true] %s47
      %53 = dma.hbm_to_vmem [thread:$0]  %s4, 2048, %s48, [#allocation6], 128, 128, 8
    $region21: #{tpu_custom_call.1} parent=1 // pred_fallthru
      _
    // Predicated region
    $region22: #{tpu_custom_call.1} parent=1 // pred_check
      _
    $region23: #{tpu_custom_call.1} parent=1 // pred_check_branch
      %55 = sbr.rel (0) target = $region25
    $region24: #{tpu_custom_call.1} parent=1 // pred_region
      _
    $region25: #{tpu_custom_call.1} parent=1 // pred_fallthru
      _
    // Predicated region
    $region26: #{tpu_custom_call.1} parent=1 // pred_check
      _
    $region27: #{tpu_custom_call.1} parent=1 // pred_check_branch
      %57 = sbr.rel (0) target = $region29
    $region28: #{tpu_custom_call.1} parent=1 // pred_region
      %58 = dma.done [#allocation3], 1536
    $region29: #{tpu_custom_call.1} parent=1 // pred_fallthru
      _
    // Predicated region
    $region30: #{tpu_custom_call.1} parent=1 // pred_check
      _
    $region31: #{tpu_custom_call.1} parent=1 // pred_check_branch
      %60 = sbr.rel (0) target = $region33
    $region32: #{tpu_custom_call.1} parent=1 // pred_region
      %61 = dma.done [#allocation6], 2048
    $region33: #{tpu_custom_call.1} parent=1 // pred_fallthru
      _
    // Predicated region
    $region34: #{tpu_custom_call.1} parent=1 // pred_check
      _
    $region35: #{tpu_custom_call.1} parent=1 // pred_check_branch
      %63 = sbr.rel (0) target = $region37
    $region36: #{tpu_custom_call.1} parent=1 // pred_region
      %64 = dma.done [#allocation6], 2048
    $region37: #{tpu_custom_call.1} parent=1 // pred_fallthru
      _
    %v66 = vld [vmem:[%s0] sm:$0xff]
    %v67 = vld [vmem:[#allocation2] sm:$0xf]
    %v68 = vld [vmem:[#allocation2 + $0x4] sm:$0xf]
    %v69 = vld [vmem:[#allocation2 + $0x8] sm:$0xf]
    %v70 = vld [vmem:[#allocation2 + $0xc] sm:$0xf]
    %v71 = vld [vmem:[#allocation2 + $0x10] sm:$0xf]
    %v72 = vld [vmem:[#allocation2 + $0x14] sm:$0xf]
    %v73 = vld [vmem:[#allocation2 + $0x18] sm:$0xf]
    %v74 = vld [vmem:[#allocation2 + $0x1c] sm:$0xf]
    %v75 = vld [vmem:[#allocation2 + $0x20] sm:$0xf]
    %v76 = vld [vmem:[#allocation2 + $0x24] sm:$0xf]
    %v77 = vld [vmem:[#allocation2 + $0x28] sm:$0xf]
    %v78 = vld [vmem:[#allocation2 + $0x2c] sm:$0xf]
    %v79 = vld [vmem:[#allocation2 + $0x30] sm:$0xf]
    %v80 = vld [vmem:[#allocation2 + $0x34] sm:$0xf]
    %v81 = vld [vmem:[#allocation2 + $0x38] sm:$0xf]
    %v82 = vld [vmem:[#allocation2 + $0x3c] sm:$0xf]
    %v83 = vld [vmem:[#allocation2 + $0x40] sm:$0xf]
    %v84 = vld [vmem:[#allocation2 + $0x44] sm:$0xf]
    %v85 = vld [vmem:[#allocation2 + $0x48] sm:$0xf]
    %v86 = vld [vmem:[#allocation2 + $0x4c] sm:$0xf]
    %v87 = vld [vmem:[#allocation2 + $0x50] sm:$0xf]
    %v88 = vld [vmem:[#allocation2 + $0x54] sm:$0xf]
    %v89 = vld [vmem:[#allocation2 + $0x58] sm:$0xf]
    %v90 = vld [vmem:[#allocation2 + $0x5c] sm:$0xf]
    %v91 = vlaneseq
    %v92 = vand.u32 %v91, 127
    %v93 = vadd.s32 %v92, 128
    %94 = vset.pattern.permute.xlu0 0
    %95 = vperm.xlu0 %94, %v66
    %v96 = vpop.permute.xlu0 %95
    %vm97 = vcmp.eq.s32.totalorder %v92, %v96
    %vm98 = vcmp.eq.s32.totalorder %v93, %v96
    %v99 = vadd.s32 %v66, 64
    %100 = vset.pattern.permute.xlu0 0
    %101 = vperm.xlu0 %100, %v99
    %v102 = vpop.permute.xlu0 %101
    %vm103 = vcmp.eq.s32.totalorder %v92, %v102
    %vm104 = vcmp.eq.s32.totalorder %v93, %v102
    %vm105 = vmor %vm97, %vm103
    %vm106 = vmor %vm98, %vm104
    %v107 = vadd.s32 %v66, 128
    %108 = vset.pattern.permute.xlu0 0
    %109 = vperm.xlu0 %108, %v107
    %v110 = vpop.permute.xlu0 %109
    %vm111 = vcmp.eq.s32.totalorder %v92, %v110
    %vm112 = vcmp.eq.s32.totalorder %v93, %v110
    %vm113 = vmor %vm105, %vm111
    %vm114 = vmor %vm106, %vm112
    %v115 = vsel %vm113, 1, 0
    %v116 = vsel %vm114, 1, 0
    %v117 = vcvt.s32.f32 %v115
    %v118 = vcvt.s32.f32 %v116
    %v119 = vpack.c.bf16 %v117, %v117
    %v120 = vpack.c.bf16 %v118, %v118
    %v145 = vunpack.c.l.b16 %v67
    %v146 = vunpack.c.l.b16 %v68
    %v147 = vunpack.c.l.b16 %v69
    %v148 = vunpack.c.l.b16 %v70
    %v149 = vunpack.c.l.b16 %v71
    %v150 = vunpack.c.l.b16 %v72
    %v151 = vunpack.c.l.b16 %v73
    %v152 = vunpack.c.l.b16 %v74
    %v153 = vunpack.c.l.b16 %v75
    %v154 = vunpack.c.l.b16 %v76
    %v155 = vunpack.c.l.b16 %v77
    %v156 = vunpack.c.l.b16 %v78
    %v157 = vunpack.c.l.b16 %v79
    %v158 = vunpack.c.l.b16 %v80
    %v159 = vunpack.c.l.b16 %v81
    %v160 = vunpack.c.l.b16 %v82
    %v161 = vunpack.c.l.b16 %v83
    %v162 = vunpack.c.l.b16 %v84
    %v163 = vunpack.c.l.b16 %v85
    %v164 = vunpack.c.l.b16 %v86
    %v165 = vunpack.c.l.b16 %v87
    %v166 = vunpack.c.l.b16 %v88
    %v167 = vunpack.c.l.b16 %v89
    %v168 = vunpack.c.l.b16 %v90
    %v169 = vpack.c.b16 %v146, %v145
    %v170 = vpack.c.b16 %v148, %v147
    %v171 = vpack.c.b16 %v150, %v149
    %v172 = vpack.c.b16 %v152, %v151
    %v173 = vpack.c.b16 %v154, %v153
    %v174 = vpack.c.b16 %v156, %v155
    %v175 = vpack.c.b16 %v158, %v157
    %v176 = vpack.c.b16 %v160, %v159
    %v177 = vpack.c.b16 %v162, %v161
    %v178 = vpack.c.b16 %v164, %v163
    %v179 = vpack.c.b16 %v166, %v165
    %v180 = vpack.c.b16 %v168, %v167
    %vm193 = vcmask 523264
    %v195 = vsel %vm193, %v120, 0
    %197 = vmatprep.subr.bf16.mxu0 0
    %198 = vmatpush1.bf16.msra.mxu0 %v176
    %199 = vmatprep.subr.bf16.mxu0 0
    %200 = vmatpush1.bf16.msra.mxu0 %v175
    %201 = vmatprep.subr.bf16.mxu0 0
    %202 = vmatpush1.bf16.msra.mxu0 %v174
    %203 = vmatprep.subr.bf16.mxu0 0
    %204 = vmatpush1.bf16.msra.mxu0 %v173
    %205 = vmatprep.subr.bf16.mxu0 0
    %206 = vmatpush1.bf16.msra.mxu0 %v172
    %207 = vmatprep.subr.bf16.mxu0 0
    %208 = vmatpush1.bf16.msra.mxu0 %v171
    %209 = vmatprep.subr.bf16.mxu0 0
    %210 = vmatpush1.bf16.msra.mxu0 %v170
    %211 = vmatprep.subr.bf16.mxu0 0
    %212 = vmatpush1.bf16.msra.mxu0 %v169
    %213 = vmatprep.subr.bf16.mxu0 0
    %214 = vmatpush2.bf16.msra.mxu0 0
    %215 = vmatprep.subr.bf16.mxu0 0
    %216 = vmatpush2.bf16.msra.mxu0 0
    %217 = vmatprep.subr.bf16.mxu0 0
    %218 = vmatpush2.bf16.msra.mxu0 0
    %219 = vmatprep.subr.bf16.mxu0 0
    %220 = vmatpush2.bf16.msra.mxu0 0
    %221 = vmatprep.subr.bf16.mxu0 0
    %222 = vmatpush2.bf16.msra.mxu0 %v180
    %223 = vmatprep.subr.bf16.mxu0 0
    %224 = vmatpush2.bf16.msra.mxu0 %v179
    %225 = vmatprep.subr.bf16.mxu0 0
    %226 = vmatpush2.bf16.msra.mxu0 %v178
    %227 = vmatprep.subr.bf16.mxu0 0
    %228 = vmatpush2.bf16.msra.mxu0 %v177
    %229 = vmatprep.mubr.bf16.mxu0 %v195
    %230 = vmatmul.mubr.bf16.gmra.mxu0 %v119
    %v231 = vpop.f32.mrf.mxu0
    %v232 = vadd.f32 0.0, %v231
    %v233 = vpop.f32.mrf.mxu0
    %v234 = vpop.f32.mrf.mxu0
    %v235 = vpop.f32.mrf.mxu0
    %236 = vdwg.mxu0
    %v237 = vld [vmem:[#allocation5] sm:$0xff]
    %v238 = vld [vmem:[#allocation5 + $0x8] sm:$0xff]
    %v239 = vld [vmem:[#allocation5 + $0x10] sm:$0xff]
    %v240 = vld [vmem:[#allocation5 + $0x18] sm:$0xff]
    %v241 = vld [vmem:[#allocation5 + $0x20] sm:$0xff]
    %v242 = vld [vmem:[#allocation5 + $0x28] sm:$0xff]
    %v243 = vld [vmem:[#allocation5 + $0x30] sm:$0xff]
    %v244 = vld [vmem:[#allocation5 + $0x38] sm:$0xff]
    %v245 = vld [vmem:[#allocation5 + $0x40] sm:$0xff]
    %v246 = vld [vmem:[#allocation5 + $0x48] sm:$0xff]
    %v247 = vld [vmem:[#allocation5 + $0x50] sm:$0xff]
    %v248 = vld [vmem:[#allocation5 + $0x58] sm:$0xff]
    %v249 = vld [vmem:[#allocation5 + $0x60] sm:$0xff]
    %v250 = vld [vmem:[#allocation5 + $0x68] sm:$0xff]
    %v251 = vld [vmem:[#allocation5 + $0x70] sm:$0xff]
    %v252 = vld [vmem:[#allocation5 + $0x78] sm:$0xff]
    %v253 = vld [vmem:[%s3] sm:$0x1]
    %v255 = vlaneseq
    %v256 = vshrl.u32 %v255, 7
    %v257 = vsub.s32 0, %v256
    %v258 = vrot.slane %v253, %v257
    %260 = vmatprep.subr.mxu0 0.0
    %261 = vmatpush1.msra.mxu0 %v252
    %262 = vmatprep.subr.mxu0 0.0
    %263 = vmatpush1.msra.mxu0 %v251
    %264 = vmatprep.subr.mxu0 0.0
    %265 = vmatpush1.msra.mxu0 %v250
    %266 = vmatprep.subr.mxu0 0.0
    %267 = vmatpush1.msra.mxu0 %v249
    %268 = vmatprep.subr.mxu0 0.0
    %269 = vmatpush1.msra.mxu0 %v248
    %270 = vmatprep.subr.mxu0 0.0
    %271 = vmatpush1.msra.mxu0 %v247
    %272 = vmatprep.subr.mxu0 0.0
    %273 = vmatpush1.msra.mxu0 %v246
    %274 = vmatprep.subr.mxu0 0.0
    %275 = vmatpush1.msra.mxu0 %v245
    %276 = vmatprep.subr.mxu0 0.0
    %277 = vmatpush1.msra.mxu0 %v244
    %278 = vmatprep.subr.mxu0 0.0
    %279 = vmatpush1.msra.mxu0 %v243
    %280 = vmatprep.subr.mxu0 0.0
    %281 = vmatpush1.msra.mxu0 %v242
    %282 = vmatprep.subr.mxu0 0.0
    %283 = vmatpush1.msra.mxu0 %v241
    %284 = vmatprep.subr.mxu0 0.0
    %285 = vmatpush1.msra.mxu0 %v240
    %286 = vmatprep.subr.mxu0 0.0
    %287 = vmatpush1.msra.mxu0 %v239
    %288 = vmatprep.subr.mxu0 0.0
    %289 = vmatpush1.msra.mxu0 %v238
    %290 = vmatprep.subr.mxu0 0.0
    %291 = vmatpush1.msra.mxu0 %v237
    %292 = vmatprep.subr.mxu0 0.0
    %293 = vmatpush2.msra.mxu0 0.0
    %294 = vmatprep.subr.mxu0 0.0
    %295 = vmatpush2.msra.mxu0 0.0
    %296 = vmatprep.subr.mxu0 0.0
    %297 = vmatpush2.msra.mxu0 0.0
    %298 = vmatprep.subr.mxu0 0.0
    %299 = vmatpush2.msra.mxu0 0.0
    %300 = vmatprep.subr.mxu0 0.0
    %301 = vmatpush2.msra.mxu0 0.0
    %302 = vmatprep.subr.mxu0 0.0
    %303 = vmatpush2.msra.mxu0 0.0
    %304 = vmatprep.subr.mxu0 0.0
    %305 = vmatpush2.msra.mxu0 0.0
    %306 = vmatprep.subr.mxu0 0.0
    %307 = vmatpush2.msra.mxu0 0.0
    %308 = vmatprep.subr.mxu0 0.0
    %309 = vmatpush2.msra.mxu0 0.0
    %310 = vmatprep.subr.mxu0 0.0
    %311 = vmatpush2.msra.mxu0 0.0
    %312 = vmatprep.subr.mxu0 0.0
    %313 = vmatpush2.msra.mxu0 0.0
    %314 = vmatprep.subr.mxu0 0.0
    %315 = vmatpush2.msra.mxu0 0.0
    %316 = vmatprep.subr.mxu0 0.0
    %317 = vmatpush2.msra.mxu0 0.0
    %318 = vmatprep.subr.mxu0 0.0
    %319 = vmatpush2.msra.mxu0 0.0
    %320 = vmatprep.subr.mxu0 0.0
    %321 = vmatpush2.msra.mxu0 0.0
    %322 = vmatprep.subr.mxu0 0.0
    %323 = vmatpush2.msra.mxu0 0.0
    %324 = vmatprep.mubr.f32.mxu0 0.0
    %325 = vmatmul.mubr.f32.gmra.mxu0 %v232
    %v326 = vpop.f32.mrf.mxu0
    %v327 = vadd.f32 %v258, %v326
    %v328 = vpop.f32.mrf.mxu0
    %329 = vdwg.mxu0
    %v330 = vxor.u32 %v327, 2147483648
    %v331 = vmul.f32 %v330, 1.442695
    %v332 = vpow.pop %v331
    %v333 = vadd.f32 %v332, 1.0
    %v334 = vrcp.pop %v333
    %v335 = vmul.f32 1.0, %v334
    %v336 = vmul.f32 %v327, %v335
    %v337 = vld [vmem:[#allocation7] sm:$0xff]
    %v338 = vld [vmem:[#allocation7 + $0x8] sm:$0xff]
    %v339 = vld [vmem:[#allocation7 + $0x10] sm:$0xff]
    %v340 = vld [vmem:[#allocation7 + $0x18] sm:$0xff]
    %v341 = vld [vmem:[#allocation7 + $0x20] sm:$0xff]
    %v342 = vld [vmem:[#allocation7 + $0x28] sm:$0xff]
    %v343 = vld [vmem:[#allocation7 + $0x30] sm:$0xff]
    %v344 = vld [vmem:[#allocation7 + $0x38] sm:$0xff]
    %v345 = vld [vmem:[#allocation7 + $0x40] sm:$0xff]
    %v346 = vld [vmem:[#allocation7 + $0x48] sm:$0xff]
    %v347 = vld [vmem:[#allocation7 + $0x50] sm:$0xff]
    %v348 = vld [vmem:[#allocation7 + $0x58] sm:$0xff]
    %v349 = vld [vmem:[#allocation7 + $0x60] sm:$0xff]
    %v350 = vld [vmem:[#allocation7 + $0x68] sm:$0xff]
    %v351 = vld [vmem:[#allocation7 + $0x70] sm:$0xff]
    %v352 = vld [vmem:[#allocation7 + $0x78] sm:$0xff]
    %v353 = vld [vmem:[%s5] sm:$0x1]
    %v355 = vlaneseq
    %v356 = vshrl.u32 %v355, 7
    %v357 = vsub.s32 0, %v356
    %v358 = vrot.slane %v353, %v357
    %360 = vmatprep.subr.mxu0 0.0
    %361 = vmatpush1.msra.mxu0 %v352
    %362 = vmatprep.subr.mxu0 0.0
    %363 = vmatpush1.msra.mxu0 %v351
    %364 = vmatprep.subr.mxu0 0.0
    %365 = vmatpush1.msra.mxu0 %v350
    %366 = vmatprep.subr.mxu0 0.0
    %367 = vmatpush1.msra.mxu0 %v349
    %368 = vmatprep.subr.mxu0 0.0
    %369 = vmatpush1.msra.mxu0 %v348
    %370 = vmatprep.subr.mxu0 0.0
    %371 = vmatpush1.msra.mxu0 %v347
    %372 = vmatprep.subr.mxu0 0.0
    %373 = vmatpush1.msra.mxu0 %v346
    %374 = vmatprep.subr.mxu0 0.0
    %375 = vmatpush1.msra.mxu0 %v345
    %376 = vmatprep.subr.mxu0 0.0
    %377 = vmatpush1.msra.mxu0 %v344
    %378 = vmatprep.subr.mxu0 0.0
    %379 = vmatpush1.msra.mxu0 %v343
    %380 = vmatprep.subr.mxu0 0.0
    %381 = vmatpush1.msra.mxu0 %v342
    %382 = vmatprep.subr.mxu0 0.0
    %383 = vmatpush1.msra.mxu0 %v341
    %384 = vmatprep.subr.mxu0 0.0
    %385 = vmatpush1.msra.mxu0 %v340
    %386 = vmatprep.subr.mxu0 0.0
    %387 = vmatpush1.msra.mxu0 %v339
    %388 = vmatprep.subr.mxu0 0.0
    %389 = vmatpush1.msra.mxu0 %v338
    %390 = vmatprep.subr.mxu0 0.0
    %391 = vmatpush1.msra.mxu0 %v337
    %392 = vmatprep.subr.mxu0 0.0
    %393 = vmatpush2.msra.mxu0 0.0
    %394 = vmatprep.subr.mxu0 0.0
    %395 = vmatpush2.msra.mxu0 0.0
    %396 = vmatprep.subr.mxu0 0.0
    %397 = vmatpush2.msra.mxu0 0.0
    %398 = vmatprep.subr.mxu0 0.0
    %399 = vmatpush2.msra.mxu0 0.0
    %400 = vmatprep.subr.mxu0 0.0
    %401 = vmatpush2.msra.mxu0 0.0
    %402 = vmatprep.subr.mxu0 0.0
    %403 = vmatpush2.msra.mxu0 0.0
    %404 = vmatprep.subr.mxu0 0.0
    %405 = vmatpush2.msra.mxu0 0.0
    %406 = vmatprep.subr.mxu0 0.0
    %407 = vmatpush2.msra.mxu0 0.0
    %408 = vmatprep.subr.mxu0 0.0
    %409 = vmatpush2.msra.mxu0 0.0
    %410 = vmatprep.subr.mxu0 0.0
    %411 = vmatpush2.msra.mxu0 0.0
    %412 = vmatprep.subr.mxu0 0.0
    %413 = vmatpush2.msra.mxu0 0.0
    %414 = vmatprep.subr.mxu0 0.0
    %415 = vmatpush2.msra.mxu0 0.0
    %416 = vmatprep.subr.mxu0 0.0
    %417 = vmatpush2.msra.mxu0 0.0
    %418 = vmatprep.subr.mxu0 0.0
    %419 = vmatpush2.msra.mxu0 0.0
    %420 = vmatprep.subr.mxu0 0.0
    %421 = vmatpush2.msra.mxu0 0.0
    %422 = vmatprep.subr.mxu0 0.0
    %423 = vmatpush2.msra.mxu0 0.0
    %424 = vmatprep.mubr.f32.mxu0 0.0
    %425 = vmatmul.mubr.f32.gmra.mxu0 %v336
    %v426 = vpop.f32.mrf.mxu0
    %v427 = vadd.f32 %v358, %v426
    %v428 = vpop.f32.mrf.mxu0
    %429 = vdwg.mxu0
    %v430 = vxor.u32 %v427, 2147483648
    %v431 = vmul.f32 %v430, 1.442695
    %v432 = vpow.pop %v431
    %v433 = vadd.f32 %v432, 1.0
    %v434 = vrcp.pop %v433
    %v435 = vmul.f32 1.0, %v434
    %v436 = vmul.f32 %v427, %v435
    %437 = vst [vmem:[#allocation8] sm:$0xff] %v436
    // Predicated region
    $region38: #{tpu_custom_call.1} parent=1 // pred_check
      _
    $region39: #{tpu_custom_call.1} parent=1 // pred_check_branch
      %439 = sbr.rel (0) target = $region41
    $region40: #{tpu_custom_call.1} parent=1 // pred_region
      %s441 = ssub.s32 128, 128
      %442 = vsyncadd [#allocation4], %s441
      %s444 = sshll.u32 [#allocation8], 4
      %s445 = int_to_ptr.vmem [resolvable:$true] %s444
      %447 = dma.vmem_to_hbm [thread:$0]  %s445, 128, %s6, [#allocation4]
    $region41: #{tpu_custom_call.1} parent=1 // pred_fallthru
      _
    // Predicated region
    $region42: #{tpu_custom_call.1} parent=1 // pred_check
      _
    $region43: #{tpu_custom_call.1} parent=1 // pred_check_branch
      %449 = sbr.rel (0) target = $region45
    $region44: #{tpu_custom_call.1} parent=1 // pred_region
      %450 = dma.done [#allocation4], 128
    $region45: #{tpu_custom_call.1} parent=1 // pred_fallthru
      _
    %451 = vsyncpa [#allocation3], 1
    %452 = vsyncpa [#allocation6], 1
    %453 = vsyncpa [#allocation4], 1

// kernel: tpu_custom_call.1
$region0: #{tpu_custom_call.1}
  #allocation0 [shape = 'u32[]', space=smem, size = 0x4, offset = 0x4, fixed_abs, tag = 'smem constant byte address 0x4 - core index']
  #allocation1 [shape = 'u32[144,128]{1,0:T(1,128)}', space=vmem, size = 0x12000, scoped, tag = 'internal scratch']
  %s0 = inlined_call_operand.vmem [shape: s32[8,1], index: 0, kind: input, shape index: {}]
  %s1 = inlined_call_operand.hbm [shape: bf16[192,128], index: 1, kind: input, shape index: {}]
  %s2 = inlined_call_operand.hbm [shape: f32[128,128], index: 2, kind: input, shape index: {}]
  %s3 = inlined_call_operand.vmem [shape: f32[1,128], index: 3, kind: input, shape index: {}]
  %s4 = inlined_call_operand.hbm [shape: f32[128,128], index: 4, kind: input, shape index: {}]
  %s5 = inlined_call_operand.vmem [shape: f32[1,128], index: 5, kind: input, shape index: {}]
  %s6 = inlined_call_operand.hbm [shape: f32[8,128], index: 6, kind: output, shape index: {}]
  %s7 = sld [smem:[#allocation0]]
  $region46: #{tpu_custom_call.1} parent=0
    _
  %s9 = ssub.s32 1, %s7
  %s10 = scalar_select 0, %s9, %s7
  $region1: #{tpu_custom_call.1} parent=0
    #allocation2 [shape = 'u8[49152]{0}', space=vmem, size = 0xc000, scoped, tag = 'input window, operand 1, single buffered']
    #allocation3 [shape = 's32[1]{0}', space=sflag, size = 0x4, scoped, tag = 'scoped memory for tpu_custom_call.1']
    #allocation4 [shape = 's32[1]{0}', space=sflag, size = 0x4, scoped, tag = 'scoped memory for tpu_custom_call.1']
    #allocation5 [shape = 'u8[65536]{0}', space=vmem, size = 0x10000, scoped, tag = 'input window, operand 2, single buffered']
    #allocation6 [shape = 's32[1]{0}', space=sflag, size = 0x4, scoped, tag = 'scoped memory for tpu_custom_call.1']
    #allocation7 [shape = 'u8[65536]{0}', space=vmem, size = 0x10000, scoped, tag = 'input window, operand 4, single buffered']
    #allocation8 [shape = 'u8[4096]{0}', space=vmem, size = 0x1000, scoped, tag = 'output window, operand 0, single buffered']
    %11 = vsyncpa [#allocation3], 0
    %12 = vsyncpa [#allocation6], 0
    %13 = vsyncpa [#allocation4], 0
    // Predicated region
    $region2: #{tpu_custom_call.1} parent=1 // pred_check
      _
    $region3: #{tpu_custom_call.1} parent=1 // pred_check_branch
      %15 = sbr.rel (0) target = $region5
    $region4: #{tpu_custom_call.1} parent=1 // pred_region
      _
    $region5: #{tpu_custom_call.1} parent=1 // pred_fallthru
      _
    // Predicated region
    $region6: #{tpu_custom_call.1} parent=1 // pred_check
      _
    $region7: #{tpu_custom_call.1} parent=1 // pred_check_branch
      %17 = sbr.rel (0) target = $region9
    $region8: #{tpu_custom_call.1} parent=1 // pred_region
      %s19 = ssub.s32 1536, 1536
      %20 = vsyncadd [#allocation3], %s19
      %s21 = sshll.u32 [#allocation2], 4
      %s22 = int_to_ptr.vmem [resolvable:$true] %s21
      %27 = dma.hbm_to_vmem [thread:$0]  %s1, 1536, %s22, [#allocation3], 64, 64, 4
    $region9: #{tpu_custom_call.1} parent=1 // pred_fallthru
      _
    // Predicated region
    $region10: #{tpu_custom_call.1} parent=1 // pred_check
      _
    $region11: #{tpu_custom_call.1} parent=1 // pred_check_branch
      %29 = sbr.rel (0) target = $region13
    $region12: #{tpu_custom_call.1} parent=1 // pred_region
      %s31 = ssub.s32 2048, 2048
      %32 = vsyncadd [#allocation6], %s31
      %s33 = sshll.u32 [#allocation5], 4
      %s34 = int_to_ptr.vmem [resolvable:$true] %s33
      %39 = dma.hbm_to_vmem [thread:$0]  %s2, 2048, %s34, [#allocation6], 128, 128, 8
    $region13: #{tpu_custom_call.1} parent=1 // pred_fallthru
      _
    // Predicated region
    $region14: #{tpu_custom_call.1} parent=1 // pred_check
      _
    $region15: #{tpu_custom_call.1} parent=1 // pred_check_branch
      %41 = sbr.rel (0) target = $region17
    $region16: #{tpu_custom_call.1} parent=1 // pred_region
      _
    $region17: #{tpu_custom_call.1} parent=1 // pred_fallthru
      _
    // Predicated region
    $region18: #{tpu_custom_call.1} parent=1 // pred_check
      _
    $region19: #{tpu_custom_call.1} parent=1 // pred_check_branch
      %43 = sbr.rel (0) target = $region21
    $region20: #{tpu_custom_call.1} parent=1 // pred_region
      %s45 = ssub.s32 2048, 2048
      %46 = vsyncadd [#allocation6], %s45
      %s47 = sshll.u32 [#allocation7], 4
      %s48 = int_to_ptr.vmem [resolvable:$true] %s47
      %53 = dma.hbm_to_vmem [thread:$0]  %s4, 2048, %s48, [#allocation6], 128, 128, 8
    $region21: #{tpu_custom_call.1} parent=1 // pred_fallthru
      _
    // Predicated region
    $region22: #{tpu_custom_call.1} parent=1 // pred_check
      _
    $region23: #{tpu_custom_call.1} parent=1 // pred_check_branch
      %55 = sbr.rel (0) target = $region25
    $region24: #{tpu_custom_call.1} parent=1 // pred_region
      _
    $region25: #{tpu_custom_call.1} parent=1 // pred_fallthru
      _
    // Predicated region
    $region26: #{tpu_custom_call.1} parent=1 // pred_check
      _
    $region27: #{tpu_custom_call.1} parent=1 // pred_check_branch
      %57 = sbr.rel (0) target = $region29
    $region28: #{tpu_custom_call.1} parent=1 // pred_region
      %58 = dma.done [#allocation3], 1536
    $region29: #{tpu_custom_call.1} parent=1 // pred_fallthru
      _
    // Predicated region
    $region30: #{tpu_custom_call.1} parent=1 // pred_check
      _
    $region31: #{tpu_custom_call.1} parent=1 // pred_check_branch
      %60 = sbr.rel (0) target = $region33
    $region32: #{tpu_custom_call.1} parent=1 // pred_region
      %61 = dma.done [#allocation6], 2048
    $region33: #{tpu_custom_call.1} parent=1 // pred_fallthru
      _
    // Predicated region
    $region34: #{tpu_custom_call.1} parent=1 // pred_check
      _
    $region35: #{tpu_custom_call.1} parent=1 // pred_check_branch
      %63 = sbr.rel (0) target = $region37
    $region36: #{tpu_custom_call.1} parent=1 // pred_region
      %64 = dma.done [#allocation6], 2048
    $region37: #{tpu_custom_call.1} parent=1 // pred_fallthru
      _
    %v66 = vld [vmem:[%s0] sm:$0xff]
    %v67 = vld [vmem:[#allocation2] sm:$0xf]
    %v68 = vld [vmem:[#allocation2 + $0x4] sm:$0xf]
    %v69 = vld [vmem:[#allocation2 + $0x8] sm:$0xf]
    %v70 = vld [vmem:[#allocation2 + $0xc] sm:$0xf]
    %v71 = vld [vmem:[#allocation2 + $0x10] sm:$0xf]
    %v72 = vld [vmem:[#allocation2 + $0x14] sm:$0xf]
    %v73 = vld [vmem:[#allocation2 + $0x18] sm:$0xf]
    %v74 = vld [vmem:[#allocation2 + $0x1c] sm:$0xf]
    %v75 = vld [vmem:[#allocation2 + $0x20] sm:$0xf]
    %v76 = vld [vmem:[#allocation2 + $0x24] sm:$0xf]
    %v77 = vld [vmem:[#allocation2 + $0x28] sm:$0xf]
    %v78 = vld [vmem:[#allocation2 + $0x2c] sm:$0xf]
    %v79 = vld [vmem:[#allocation2 + $0x30] sm:$0xf]
    %v80 = vld [vmem:[#allocation2 + $0x34] sm:$0xf]
    %v81 = vld [vmem:[#allocation2 + $0x38] sm:$0xf]
    %v82 = vld [vmem:[#allocation2 + $0x3c] sm:$0xf]
    %v83 = vld [vmem:[#allocation2 + $0x40] sm:$0xf]
    %v84 = vld [vmem:[#allocation2 + $0x44] sm:$0xf]
    %v85 = vld [vmem:[#allocation2 + $0x48] sm:$0xf]
    %v86 = vld [vmem:[#allocation2 + $0x4c] sm:$0xf]
    %v87 = vld [vmem:[#allocation2 + $0x50] sm:$0xf]
    %v88 = vld [vmem:[#allocation2 + $0x54] sm:$0xf]
    %v89 = vld [vmem:[#allocation2 + $0x58] sm:$0xf]
    %v90 = vld [vmem:[#allocation2 + $0x5c] sm:$0xf]
    %v91 = vlaneseq
    %v92 = vand.u32 %v91, 127
    %v93 = vadd.s32 %v92, 128
    %94 = vset.pattern.permute.xlu0 0
    %95 = vperm.xlu0 %94, %v66
    %v96 = vpop.permute.xlu0 %95
    %vm97 = vcmp.eq.s32.totalorder %v92, %v96
    %vm98 = vcmp.eq.s32.totalorder %v93, %v96
    %v99 = vadd.s32 %v66, 64
    %100 = vset.pattern.permute.xlu0 0
    %101 = vperm.xlu0 %100, %v99
    %v102 = vpop.permute.xlu0 %101
    %vm103 = vcmp.eq.s32.totalorder %v92, %v102
    %vm104 = vcmp.eq.s32.totalorder %v93, %v102
    %vm105 = vmor %vm97, %vm103
    %vm106 = vmor %vm98, %vm104
    %v107 = vadd.s32 %v66, 128
    %108 = vset.pattern.permute.xlu0 0
    %109 = vperm.xlu0 %108, %v107
    %v110 = vpop.permute.xlu0 %109
    %vm111 = vcmp.eq.s32.totalorder %v92, %v110
    %vm112 = vcmp.eq.s32.totalorder %v93, %v110
    %vm113 = vmor %vm105, %vm111
    %vm114 = vmor %vm106, %vm112
    %v115 = vsel %vm113, 1, 0
    %v116 = vsel %vm114, 1, 0
    %v117 = vcvt.s32.f32 %v115
    %v118 = vcvt.s32.f32 %v116
    %v119 = vpack.c.bf16 %v117, %v117
    %v120 = vpack.c.bf16 %v118, %v118
    %v145 = vunpack.c.l.b16 %v67
    %v146 = vunpack.c.l.b16 %v68
    %v147 = vunpack.c.l.b16 %v69
    %v148 = vunpack.c.l.b16 %v70
    %v149 = vunpack.c.l.b16 %v71
    %v150 = vunpack.c.l.b16 %v72
    %v151 = vunpack.c.l.b16 %v73
    %v152 = vunpack.c.l.b16 %v74
    %v153 = vunpack.c.l.b16 %v75
    %v154 = vunpack.c.l.b16 %v76
    %v155 = vunpack.c.l.b16 %v77
    %v156 = vunpack.c.l.b16 %v78
    %v157 = vunpack.c.l.b16 %v79
    %v158 = vunpack.c.l.b16 %v80
    %v159 = vunpack.c.l.b16 %v81
    %v160 = vunpack.c.l.b16 %v82
    %v161 = vunpack.c.l.b16 %v83
    %v162 = vunpack.c.l.b16 %v84
    %v163 = vunpack.c.l.b16 %v85
    %v164 = vunpack.c.l.b16 %v86
    %v165 = vunpack.c.l.b16 %v87
    %v166 = vunpack.c.l.b16 %v88
    %v167 = vunpack.c.l.b16 %v89
    %v168 = vunpack.c.l.b16 %v90
    %v169 = vpack.c.b16 %v146, %v145
    %v170 = vpack.c.b16 %v148, %v147
    %v171 = vpack.c.b16 %v150, %v149
    %v172 = vpack.c.b16 %v152, %v151
    %v173 = vpack.c.b16 %v154, %v153
    %v174 = vpack.c.b16 %v156, %v155
    %v175 = vpack.c.b16 %v158, %v157
    %v176 = vpack.c.b16 %v160, %v159
    %v177 = vpack.c.b16 %v162, %v161
    %v178 = vpack.c.b16 %v164, %v163
    %v179 = vpack.c.b16 %v166, %v165
    %v180 = vpack.c.b16 %v168, %v167
    %vm193 = vcmask 523264
    %v195 = vsel %vm193, %v120, 0
    %197 = vmatprep.subr.bf16.mxu0 0
    %198 = vmatpush1.bf16.msra.mxu0 %v176
    %199 = vmatprep.subr.bf16.mxu0 0
    %200 = vmatpush1.bf16.msra.mxu0 %v175
    %201 = vmatprep.subr.bf16.mxu0 0
    %202 = vmatpush1.bf16.msra.mxu0 %v174
    %203 = vmatprep.subr.bf16.mxu0 0
    %204 = vmatpush1.bf16.msra.mxu0 %v173
    %205 = vmatprep.subr.bf16.mxu0 0
    %206 = vmatpush1.bf16.msra.mxu0 %v172
    %207 = vmatprep.subr.bf16.mxu0 0
    %208 = vmatpush1.bf16.msra.mxu0 %v171
    %209 = vmatprep.subr.bf16.mxu0 0
    %210 = vmatpush1.bf16.msra.mxu0 %v170
    %211 = vmatprep.subr.bf16.mxu0 0
    %212 = vmatpush1.bf16.msra.mxu0 %v169
    %213 = vmatprep.subr.bf16.mxu0 0
    %214 = vmatpush2.bf16.msra.mxu0 0
    %215 = vmatprep.subr.bf16.mxu0 0
    %216 = vmatpush2.bf16.msra.mxu0 0
    %217 = vmatprep.subr.bf16.mxu0 0
    %218 = vmatpush2.bf16.msra.mxu0 0
    %219 = vmatprep.subr.bf16.mxu0 0
    %220 = vmatpush2.bf16.msra.mxu0 0
    %221 = vmatprep.subr.bf16.mxu0 0
    %222 = vmatpush2.bf16.msra.mxu0 %v180
    %223 = vmatprep.subr.bf16.mxu0 0
    %224 = vmatpush2.bf16.msra.mxu0 %v179
    %225 = vmatprep.subr.bf16.mxu0 0
    %226 = vmatpush2.bf16.msra.mxu0 %v178
    %227 = vmatprep.subr.bf16.mxu0 0
    %228 = vmatpush2.bf16.msra.mxu0 %v177
    %229 = vmatprep.mubr.bf16.mxu0 %v195
    %230 = vmatmul.mubr.bf16.gmra.mxu0 %v119
    %v231 = vpop.f32.mrf.mxu0
    %v232 = vadd.f32 0.0, %v231
    %v233 = vpop.f32.mrf.mxu0
    %v234 = vpop.f32.mrf.mxu0
    %v235 = vpop.f32.mrf.mxu0
    %236 = vdwg.mxu0
    %v237 = vld [vmem:[#allocation5] sm:$0xff]
    %v238 = vld [vmem:[#allocation5 + $0x8] sm:$0xff]
    %v239 = vld [vmem:[#allocation5 + $0x10] sm:$0xff]
    %v240 = vld [vmem:[#allocation5 + $0x18] sm:$0xff]
    %v241 = vld [vmem:[#allocation5 + $0x20] sm:$0xff]
    %v242 = vld [vmem:[#allocation5 + $0x28] sm:$0xff]
    %v243 = vld [vmem:[#allocation5 + $0x30] sm:$0xff]
    %v244 = vld [vmem:[#allocation5 + $0x38] sm:$0xff]
    %v245 = vld [vmem:[#allocation5 + $0x40] sm:$0xff]
    %v246 = vld [vmem:[#allocation5 + $0x48] sm:$0xff]
    %v247 = vld [vmem:[#allocation5 + $0x50] sm:$0xff]
    %v248 = vld [vmem:[#allocation5 + $0x58] sm:$0xff]
    %v249 = vld [vmem:[#allocation5 + $0x60] sm:$0xff]
    %v250 = vld [vmem:[#allocation5 + $0x68] sm:$0xff]
    %v251 = vld [vmem:[#allocation5 + $0x70] sm:$0xff]
    %v252 = vld [vmem:[#allocation5 + $0x78] sm:$0xff]
    %v253 = vld [vmem:[%s3] sm:$0x1]
    %v255 = vlaneseq
    %v256 = vshrl.u32 %v255, 7
    %v257 = vsub.s32 0, %v256
    %v258 = vrot.slane %v253, %v257
    %260 = vmatprep.subr.mxu0 0.0
    %261 = vmatpush1.msra.mxu0 %v252
    %262 = vmatprep.subr.mxu0 0.0
    %263 = vmatpush1.msra.mxu0 %v251
    %264 = vmatprep.subr.mxu0 0.0
    %265 = vmatpush1.msra.mxu0 %v250
    %266 = vmatprep.subr.mxu0 0.0
    %267 = vmatpush1.msra.mxu0 %v249
    %268 = vmatprep.subr.mxu0 0.0
    %269 = vmatpush1.msra.mxu0 %v248
    %270 = vmatprep.subr.mxu0 0.0
    %271 = vmatpush1.msra.mxu0 %v247
    %272 = vmatprep.subr.mxu0 0.0
    %273 = vmatpush1.msra.mxu0 %v246
    %274 = vmatprep.subr.mxu0 0.0
    %275 = vmatpush1.msra.mxu0 %v245
    %276 = vmatprep.subr.mxu0 0.0
    %277 = vmatpush1.msra.mxu0 %v244
    %278 = vmatprep.subr.mxu0 0.0
    %279 = vmatpush1.msra.mxu0 %v243
    %280 = vmatprep.subr.mxu0 0.0
    %281 = vmatpush1.msra.mxu0 %v242
    %282 = vmatprep.subr.mxu0 0.0
    %283 = vmatpush1.msra.mxu0 %v241
    %284 = vmatprep.subr.mxu0 0.0
    %285 = vmatpush1.msra.mxu0 %v240
    %286 = vmatprep.subr.mxu0 0.0
    %287 = vmatpush1.msra.mxu0 %v239
    %288 = vmatprep.subr.mxu0 0.0
    %289 = vmatpush1.msra.mxu0 %v238
    %290 = vmatprep.subr.mxu0 0.0
    %291 = vmatpush1.msra.mxu0 %v237
    %292 = vmatprep.subr.mxu0 0.0
    %293 = vmatpush2.msra.mxu0 0.0
    %294 = vmatprep.subr.mxu0 0.0
    %295 = vmatpush2.msra.mxu0 0.0
    %296 = vmatprep.subr.mxu0 0.0
    %297 = vmatpush2.msra.mxu0 0.0
    %298 = vmatprep.subr.mxu0 0.0
    %299 = vmatpush2.msra.mxu0 0.0
    %300 = vmatprep.subr.mxu0 0.0
    %301 = vmatpush2.msra.mxu0 0.0
    %302 = vmatprep.subr.mxu0 0.0
    %303 = vmatpush2.msra.mxu0 0.0
    %304 = vmatprep.subr.mxu0 0.0
    %305 = vmatpush2.msra.mxu0 0.0
    %306 = vmatprep.subr.mxu0 0.0
    %307 = vmatpush2.msra.mxu0 0.0
    %308 = vmatprep.subr.mxu0 0.0
    %309 = vmatpush2.msra.mxu0 0.0
    %310 = vmatprep.subr.mxu0 0.0
    %311 = vmatpush2.msra.mxu0 0.0
    %312 = vmatprep.subr.mxu0 0.0
    %313 = vmatpush2.msra.mxu0 0.0
    %314 = vmatprep.subr.mxu0 0.0
    %315 = vmatpush2.msra.mxu0 0.0
    %316 = vmatprep.subr.mxu0 0.0
    %317 = vmatpush2.msra.mxu0 0.0
    %318 = vmatprep.subr.mxu0 0.0
    %319 = vmatpush2.msra.mxu0 0.0
    %320 = vmatprep.subr.mxu0 0.0
    %321 = vmatpush2.msra.mxu0 0.0
    %322 = vmatprep.subr.mxu0 0.0
    %323 = vmatpush2.msra.mxu0 0.0
    %324 = vmatprep.mubr.f32.mxu0 0.0
    %325 = vmatmul.mubr.f32.gmra.mxu0 %v232
    %v326 = vpop.f32.mrf.mxu0
    %v327 = vadd.f32 %v258, %v326
    %v328 = vpop.f32.mrf.mxu0
    %329 = vdwg.mxu0
    %v330 = vxor.u32 %v327, 2147483648
    %v331 = vmul.f32 %v330, 1.442695
    %v332 = vpow.pop %v331
    %v333 = vadd.f32 %v332, 1.0
    %v334 = vrcp.pop %v333
    %v335 = vmul.f32 1.0, %v334
    %v336 = vmul.f32 %v327, %v335
    %v337 = vld [vmem:[#allocation7] sm:$0xff]
    %v338 = vld [vmem:[#allocation7 + $0x8] sm:$0xff]
    %v339 = vld [vmem:[#allocation7 + $0x10] sm:$0xff]
    %v340 = vld [vmem:[#allocation7 + $0x18] sm:$0xff]
    %v341 = vld [vmem:[#allocation7 + $0x20] sm:$0xff]
    %v342 = vld [vmem:[#allocation7 + $0x28] sm:$0xff]
    %v343 = vld [vmem:[#allocation7 + $0x30] sm:$0xff]
    %v344 = vld [vmem:[#allocation7 + $0x38] sm:$0xff]
    %v345 = vld [vmem:[#allocation7 + $0x40] sm:$0xff]
    %v346 = vld [vmem:[#allocation7 + $0x48] sm:$0xff]
    %v347 = vld [vmem:[#allocation7 + $0x50] sm:$0xff]
    %v348 = vld [vmem:[#allocation7 + $0x58] sm:$0xff]
    %v349 = vld [vmem:[#allocation7 + $0x60] sm:$0xff]
    %v350 = vld [vmem:[#allocation7 + $0x68] sm:$0xff]
    %v351 = vld [vmem:[#allocation7 + $0x70] sm:$0xff]
    %v352 = vld [vmem:[#allocation7 + $0x78] sm:$0xff]
    %v353 = vld [vmem:[%s5] sm:$0x1]
    %v355 = vlaneseq
    %v356 = vshrl.u32 %v355, 7
    %v357 = vsub.s32 0, %v356
    %v358 = vrot.slane %v353, %v357
    %360 = vmatprep.subr.mxu0 0.0
    %361 = vmatpush1.msra.mxu0 %v352
    %362 = vmatprep.subr.mxu0 0.0
    %363 = vmatpush1.msra.mxu0 %v351
    %364 = vmatprep.subr.mxu0 0.0
    %365 = vmatpush1.msra.mxu0 %v350
    %366 = vmatprep.subr.mxu0 0.0
    %367 = vmatpush1.msra.mxu0 %v349
    %368 = vmatprep.subr.mxu0 0.0
    %369 = vmatpush1.msra.mxu0 %v348
    %370 = vmatprep.subr.mxu0 0.0
    %371 = vmatpush1.msra.mxu0 %v347
    %372 = vmatprep.subr.mxu0 0.0
    %373 = vmatpush1.msra.mxu0 %v346
    %374 = vmatprep.subr.mxu0 0.0
    %375 = vmatpush1.msra.mxu0 %v345
    %376 = vmatprep.subr.mxu0 0.0
    %377 = vmatpush1.msra.mxu0 %v344
    %378 = vmatprep.subr.mxu0 0.0
    %379 = vmatpush1.msra.mxu0 %v343
    %380 = vmatprep.subr.mxu0 0.0
    %381 = vmatpush1.msra.mxu0 %v342
    %382 = vmatprep.subr.mxu0 0.0
    %383 = vmatpush1.msra.mxu0 %v341
    %384 = vmatprep.subr.mxu0 0.0
    %385 = vmatpush1.msra.mxu0 %v340
    %386 = vmatprep.subr.mxu0 0.0
    %387 = vmatpush1.msra.mxu0 %v339
    %388 = vmatprep.subr.mxu0 0.0
    %389 = vmatpush1.msra.mxu0 %v338
    %390 = vmatprep.subr.mxu0 0.0
    %391 = vmatpush1.msra.mxu0 %v337
    %392 = vmatprep.subr.mxu0 0.0
    %393 = vmatpush2.msra.mxu0 0.0
    %394 = vmatprep.subr.mxu0 0.0
    %395 = vmatpush2.msra.mxu0 0.0
    %396 = vmatprep.subr.mxu0 0.0
    %397 = vmatpush2.msra.mxu0 0.0
    %398 = vmatprep.subr.mxu0 0.0
    %399 = vmatpush2.msra.mxu0 0.0
    %400 = vmatprep.subr.mxu0 0.0
    %401 = vmatpush2.msra.mxu0 0.0
    %402 = vmatprep.subr.mxu0 0.0
    %403 = vmatpush2.msra.mxu0 0.0
    %404 = vmatprep.subr.mxu0 0.0
    %405 = vmatpush2.msra.mxu0 0.0
    %406 = vmatprep.subr.mxu0 0.0
    %407 = vmatpush2.msra.mxu0 0.0
    %408 = vmatprep.subr.mxu0 0.0
    %409 = vmatpush2.msra.mxu0 0.0
    %410 = vmatprep.subr.mxu0 0.0
    %411 = vmatpush2.msra.mxu0 0.0
    %412 = vmatprep.subr.mxu0 0.0
    %413 = vmatpush2.msra.mxu0 0.0
    %414 = vmatprep.subr.mxu0 0.0
    %415 = vmatpush2.msra.mxu0 0.0
    %416 = vmatprep.subr.mxu0 0.0
    %417 = vmatpush2.msra.mxu0 0.0
    %418 = vmatprep.subr.mxu0 0.0
    %419 = vmatpush2.msra.mxu0 0.0
    %420 = vmatprep.subr.mxu0 0.0
    %421 = vmatpush2.msra.mxu0 0.0
    %422 = vmatprep.subr.mxu0 0.0
    %423 = vmatpush2.msra.mxu0 0.0
    %424 = vmatprep.mubr.f32.mxu0 0.0
    %425 = vmatmul.mubr.f32.gmra.mxu0 %v336
    %v426 = vpop.f32.mrf.mxu0
    %v427 = vadd.f32 %v358, %v426
    %v428 = vpop.f32.mrf.mxu0
    %429 = vdwg.mxu0
    %v430 = vxor.u32 %v427, 2147483648
    %v431 = vmul.f32 %v430, 1.442695
    %v432 = vpow.pop %v431
    %v433 = vadd.f32 %v432, 1.0
    %v434 = vrcp.pop %v433
    %v435 = vmul.f32 1.0, %v434
    %v436 = vmul.f32 %v427, %v435
    %437 = vst [vmem:[#allocation8] sm:$0xff] %v436
    // Predicated region
    $region38: #{tpu_custom_call.1} parent=1 // pred_check
      _
    $region39: #{tpu_custom_call.1} parent=1 // pred_check_branch
      %439 = sbr.rel (0) target = $region41
    $region40: #{tpu_custom_call.1} parent=1 // pred_region
      %s441 = ssub.s32 128, 128
      %442 = vsyncadd [#allocation4], %s441
      %s444 = sshll.u32 [#allocation8], 4
      %s445 = int_to_ptr.vmem [resolvable:$true] %s444
      %447 = dma.vmem_to_hbm [thread:$0]  %s445, 128, %s6, [#allocation4]
    $region41: #{tpu_custom_call.1} parent=1 // pred_fallthru
      _
    // Predicated region
    $region42: #{tpu_custom_call.1} parent=1 // pred_check
      _
    $region43: #{tpu_custom_call.1} parent=1 // pred_check_branch
      %449 = sbr.rel (0) target = $region45
    $region44: #{tpu_custom_call.1} parent=1 // pred_region
      %450 = dma.done [#allocation4], 128
    $region45: #{tpu_custom_call.1} parent=1 // pred_fallthru
      _
    %451 = vsyncpa [#allocation3], 1
    %452 = vsyncpa [#allocation6], 1
    %453 = vsyncpa [#allocation4], 1

</llo_original>
